<compile_context>
chip_gen: v6e
topology: v6e:2x2x1
jax: 0.10.0
libtpu: 0.0.40
codegen_flags: <defaults>
</compile_context>

<pallas_src>
import jax
import jax.numpy as jnp
from jax import lax
from jax.experimental import pallas as pl
from jax.experimental.pallas import tpu as pltpu


# ----------------------------- Pallas kernel --------------------------------
def gru_recurrence_kernel(h0_ref, xproj_ref, keep_ref, whh_ref, bhn_ref,
                          out_ref, hT_ref, h_scratch):
    """One (batch-chunk, time-chunk) grid step of the serial GRU recurrence.

    h0_ref    : (Bc, H)       f32   initial hidden state for this batch chunk
    xproj_ref : (Tc, Bc, 3H)  bf16/f32  x @ Wih_cat + folded biases, gate order [r|z|n]
    keep_ref  : (Tc, Bc, 1)   bf16  1 - reset  (exact 0/1)
    whh_ref   : (H, 3H)       bf16/f32 fused hidden->hidden weights, gate order [r|z|n]
    bhn_ref   : (1, H)        f32   hidden bias of the n gate (only one not folded)
    out_ref   : (Tc, Bc, H)   f32   per-step outputs
    hT_ref    : (Bc, H)       f32   final hidden state (written on last T chunk)
    h_scratch : (Bc, H)       f32   persistent h carry across T chunks
    """
    t_chunk = pl.program_id(1)
    Tc = xproj_ref.shape[0]
    Bc, H = h_scratch.shape

    @pl.when(t_chunk == 0)
    def _():
        h_scratch[...] = h0_ref[...]

    # Resident for the whole chunk; broadcast hoisted out of the time loop
    # (JAX does not CSE broadcast_in_dim under unroll).
    whh = whh_ref[...]
    bhn = jnp.broadcast_to(bhn_ref[...], (Bc, H))

    def step(t, h):
        # per-element reset mask (no-op away from segment boundaries)
        h = h * keep_ref[t].astype(jnp.float32)                    # (Bc, H)
        gx = xproj_ref[t].astype(jnp.float32)                      # (Bc, 3H)
        # single fused MXU matmul for all three hidden projections, f32 accumulate
        gh = jnp.dot(h.astype(whh.dtype), whh,
                     preferred_element_type=jnp.float32)           # (Bc, 3H)
        r = jax.nn.sigmoid(gx[:, 0:H] + gh[:, 0:H])
        z = jax.nn.sigmoid(gx[:, H:2 * H] + gh[:, H:2 * H])
        n = jnp.tanh(gx[:, 2 * H:] + r * (gh[:, 2 * H:] + bhn))
        h_new = (1.0 - z) * n + z * h
        # TODO(synk): pick H % 128 == 0 in production so this store and the gate
        # slices above are lane-aligned (no vst.msk / cross-tile slice copies).
        out_ref[t] = h_new.astype(out_ref.dtype)
        return h_new

    # Partial unroll: keeps MXU/EUP/VPU overlap across steps without vreg spills.
    h_final = lax.fori_loop(0, Tc, step, h_scratch[...], unroll=4)
    h_scratch[...] = h_final

    @pl.when(t_chunk == pl.num_programs(1) - 1)
    def _():
        hT_ref[...] = h_final


# --------------------------- block-size helpers -------------------------------
def _auto_block_t(T, block_b, H, xproj_bytes, out_bytes=4, budget_bytes=6 << 20):
    """Largest divisor of T whose double-buffered streaming footprint fits `budget`."""
    # per-timestep streamed bytes (keep pads its last dim to 128 lanes in VMEM)
    per_t = 2 * block_b * (3 * H * xproj_bytes + 128 * 2 + H * out_bytes)
    bt = max(1, min(T, budget_bytes // max(per_t, 1)))
    while T % bt:
        bt -= 1
    return bt


# ------------------------------ wrapper --------------------------------------
def rnn_layer_forward(x, state, reset, params, *, block_b=None, block_t=None,
                      compute_dtype=jnp.bfloat16):
    """Equivalent of RNNLayer.forward for rnn_type='gru', rnn_layers=1, norm=None.

    x:     (T, B, I) float32
    state: (1, B, H) float32   (GRU hidden state, layer-major like PyTorch)
    reset: (T, B)    float32 of 0./1.
    returns (outputs (T, B, H), new_state (1, B, H))

    compute_dtype: dtype of the streamed xproj and of the matmul operands
      (bf16 = production fast path; f32 = tight-validation path).
    """
    T, B, I = x.shape
    H = params["whh"].shape[-1]

    # ---- batch chunking (parallel axis) ----
    # TODO(synk): production configs should pick block_b >= 128 (fills the MXU M
    # dimension) and ~B/2 on v7x so both TensorCores get a program; toy shapes use B.
    if block_b is None or B % block_b != 0:
        block_b = B

    xbytes = jnp.dtype(compute_dtype).itemsize
    out_bytes = 4   # TODO(synk): bf16 outputs halve vst/HBM-write pressure (big on v5e)
    # ---- time chunking (streamed / pipelined axis) ----
    if block_t is None or T % block_t != 0:
        block_t = _auto_block_t(T, block_b, H, xbytes, out_bytes)

    # ---- fuse / fold parameters (gate order [r, z, n]) ----
    wih_cat = jnp.concatenate(
        [params["wih"][0], params["wih"][1], params["wih"][2]], axis=-1)        # (I, 3H)
    whh_cat = jnp.concatenate(
        [params["whh"][0], params["whh"][1], params["whh"][2]], axis=-1)        # (H, 3H)
    bih, bhh = params["bih"], params["bhh"]
    bias_x = jnp.concatenate([bih[0] + bhh[0], bih[1] + bhh[1], bih[2]], axis=-1)  # (1, 3H)
    bhn = bhh[2].astype(jnp.float32)                                               # (1, H)

    # ---- hoist the (fully parallel) input projection out of the recurrence ----
    if compute_dtype == jnp.float32:
        # validation path: f32 / HIGHEST, matches the f32 reference within 1e-4
        xproj = (jnp.dot(x.reshape(T * B, I), wih_cat,
                         precision=lax.Precision.HIGHEST) + bias_x)
        xproj = xproj.reshape(T, B, 3 * H)
    else:
        # production path: bf16 operands, f32 accumulate, bf16 storage (halves the
        # HBM/DMA traffic of the dominant streamed operand)
        xproj = (jnp.dot(x.astype(compute_dtype).reshape(T * B, I),
                         wih_cat.astype(compute_dtype),
                         preferred_element_type=jnp.float32) + bias_x)
        xproj = xproj.reshape(T, B, 3 * H).astype(compute_dtype)

    whh_cat = whh_cat.astype(compute_dtype)
    h0 = state[0].astype(jnp.float32)
    # keep = 1 - reset, precomputed once (bf16 holds 0/1 exactly).
    # TODO(synk): the (Tc, Bc, 1) keep block pads its last dim to 128 lanes in VMEM;
    # restructure to a lane-dense layout if it ever shows in the DMA profile.
    keep = (1.0 - reset)[..., None].astype(jnp.bfloat16)                          # (T, B, 1)

    # ---- explicit VMEM budget with headroom (v5e 16 MiB scoped default, v7x 64 MiB) ----
    stream = 2 * block_t * block_b * (3 * H * xbytes + 128 * 2 + H * out_bytes)
    resident = H * 3 * H * xbytes + 4 * block_b * H * 4 + 3 * H * 4
    vmem_limit = int(min(max(2 * (stream + resident), 16 << 20), 96 << 20))

    grid = (B // block_b, T // block_t)
    out, hT = pl.pallas_call(
        gru_recurrence_kernel,
        out_shape=(
            jax.ShapeDtypeStruct((T, B, H), jnp.float32),
            jax.ShapeDtypeStruct((B, H), jnp.float32),
        ),
        grid=grid,
        in_specs=[
            pl.BlockSpec((block_b, H), lambda b, t: (b, 0)),                      # h0
            pl.BlockSpec((block_t, block_b, 3 * H), lambda b, t: (t, b, 0)),      # xproj
            pl.BlockSpec((block_t, block_b, 1), lambda b, t: (t, b, 0)),          # keep
            pl.BlockSpec((H, 3 * H), lambda b, t: (0, 0)),                        # W_hh
            pl.BlockSpec((1, H), lambda b, t: (0, 0)),                            # b_hn
        ],
        out_specs=(
            pl.BlockSpec((block_t, block_b, H), lambda b, t: (t, b, 0)),          # outputs
            pl.BlockSpec((block_b, H), lambda b, t: (b, 0)),                      # h_T
        ),
        scratch_shapes=[pltpu.VMEM((block_b, H), jnp.float32)],                   # h carry
        compiler_params=pltpu.CompilerParams(
            dimension_semantics=("parallel", "arbitrary"),
            vmem_limit_bytes=vmem_limit),
    )(h0, xproj, keep, whh_cat, bhn)

    # TODO(synk): 'lstm' branch and LayerNorm (rnn_norm=True) variants not wired up.
    # TODO(synk): for latency-bound tiny-batch configs, interleave 2 independent batch
    # sub-chunks per program (two h carries in the fori_loop) and/or hold W_hh resident
    # in the MXU staging registers via pltpu.matmul_push_rhs / matmul_acc_lhs.
    return out, hT[None]


# ------------------------- deterministic params -------------------------------
def _orthogonal(key, shape):
    a = jax.random.normal(key, shape, jnp.float32)
    q, r = jnp.linalg.qr(a)
    q = q * jnp.sign(jnp.diagonal(r))[None, :]
    return q


def make_gru_params(key, inputs_dim, hidden_dim):
    k_ih, k_hh = jax.random.split(key)
    # PyTorch layout: weight_ih_l0 (3H, I), weight_hh_l0 (3H, H), gate order [r, z, n]
    w_ih = _orthogonal(k_ih, (3 * hidden_dim, inputs_dim))
    w_hh = _orthogonal(k_hh, (3 * hidden_dim, hidden_dim))
    # reshape to (3, out, in) then transpose to (3, in, out) so compute does x @ W
    wih = jnp.transpose(w_ih.reshape(3, hidden_dim, inputs_dim), (0, 2, 1))
    whh = jnp.transpose(w_hh.reshape(3, hidden_dim, hidden_dim), (0, 2, 1))
    # biases initialized to 0 (nn.init.constant_(param, 0))
    bih = jnp.zeros((3, 1, hidden_dim), jnp.float32)
    bhh = jnp.zeros((3, 1, hidden_dim), jnp.float32)
    return {"wih": wih, "whh": whh, "bih": bih, "bhh": bhh}


# ------------------------------ pure-JAX ref -----------------------------------
def gru_reference(x, state, reset, params):
    wih, whh, bih, bhh = params["wih"], params["whh"], params["bih"], params["bhh"]
    P = lax.Precision.HIGHEST

    def step(h, inp):
        x_t, r_t = inp
        h = h * (1.0 - r_t)[:, None]
        i_r = jnp.dot(x_t, wih[0], precision=P) + bih[0]
        i_z = jnp.dot(x_t, wih[1], precision=P) + bih[1]
        i_n = jnp.dot(x_t, wih[2], precision=P) + bih[2]
        h_r = jnp.dot(h, whh[0], precision=P) + bhh[0]
        h_z = jnp.dot(h, whh[1], precision=P) + bhh[1]
        h_n = jnp.dot(h, whh[2], precision=P) + bhh[2]
        r = jax.nn.sigmoid(i_r + h_r)
        z = jax.nn.sigmoid(i_z + h_z)
        n = jnp.tanh(i_n + r * h_n)
        h_new = (1.0 - z) * n + z * h
        return h_new, h_new

    hT, outs = lax.scan(step, state[0], (x, reset))
    return outs, hT[None]


# --------------------------------- main ----------------------------------------
if __name__ == "__main__":
    T, B, I, H = 8, 4, 32, 32

    key = jax.random.PRNGKey(0)
    k_x, k_h, k_r, k_w = jax.random.split(key, 4)

    x = jax.random.normal(k_x, (T, B, I), jnp.float32)
    state = jax.random.normal(k_h, (1, B, H), jnp.float32)          # (num_layers, B, H)
    reset = jax.random.bernoulli(k_r, 0.3, (T, B)).astype(jnp.float32)

    params = make_gru_params(k_w, I, H)
    ref_out, ref_state = gru_reference(x, state, reset, params)

    # Production path: bf16 streamed xproj + bf16 recurrent matmul (f32 carry/gates).
    # block_t=4 forces a 2-chunk T grid so the cross-chunk h carry is exercised.
    out, new_state = rnn_layer_forward(x, state, reset, params,
                                       block_t=4, compute_dtype=jnp.bfloat16)
    out = jax.block_until_ready(out)
    new_state = jax.block_until_ready(new_state)
    assert out.shape == (T, B, H) and new_state.shape == (1, B, H)
    # bf16 operand rounding accumulates over the recurrence -> looser tolerance.
    assert jnp.allclose(out, ref_out, atol=5e-2, rtol=5e-2)
    assert jnp.allclose(new_state, ref_state, atol=5e-2, rtol=5e-2)

    # Validation path: same kernel with f32 operands -> tight structural check.
    out32, state32 = rnn_layer_forward(x, state, reset, params,
                                       block_t=4, compute_dtype=jnp.float32)
    out32 = jax.block_until_ready(out32)
    state32 = jax.block_until_ready(state32)
    assert jnp.allclose(out32, ref_out, atol=1e-4, rtol=1e-4)
    assert jnp.allclose(state32, ref_state, atol=1e-4, rtol=1e-4)

    print("KERNEL_OK")
</pallas_src>

<mosaic_0001>
module attributes {stable_mosaic.version = 11 : i64} {
  func.func @gru_recurrence_kernel(%arg0: i32, %arg1: i32, %arg2: memref<4x32xf32, #tpu.memory_space<vmem>>, %arg3: memref<4x4x96xbf16, #tpu.memory_space<vmem>>, %arg4: memref<4x4x1xbf16, #tpu.memory_space<vmem>>, %arg5: memref<32x96xbf16, #tpu.memory_space<vmem>>, %arg6: memref<1x32xf32, #tpu.memory_space<vmem>>, %arg7: memref<4x4x32xf32, #tpu.memory_space<vmem>>, %arg8: memref<4x32xf32, #tpu.memory_space<vmem>>, %arg9: memref<4x32xf32, #tpu.memory_space<vmem>>) attributes {dimension_semantics = [#tpu.dimension_semantics<parallel>, #tpu.dimension_semantics<arbitrary>], iteration_bounds = array<i64: 1, 2>, scalar_prefetch = 0 : i64, scratch_operands = 1 : i64, tpu.core_type = #tpu.core_type<tc>, window_params = [{transform_indices = @transform_0, window_bounds = array<i64: 4, 32>}, {transform_indices = @transform_1, window_bounds = array<i64: 4, 4, 96>}, {transform_indices = @transform_2, window_bounds = array<i64: 4, 4, 1>}, {pipeline_mode = #tpu.pipeline_mode<synchronous>, transform_indices = @transform_3, window_bounds = array<i64: 32, 96>}, {pipeline_mode = #tpu.pipeline_mode<synchronous>, transform_indices = @transform_4, window_bounds = array<i64: 1, 32>}, {transform_indices = @transform_5, window_bounds = array<i64: 4, 4, 32>}, {transform_indices = @transform_6, window_bounds = array<i64: 4, 32>}]} {
    %c0_i32 = arith.constant 0 : i32
    %0 = arith.cmpi eq, %arg1, %c0_i32 : i32
    %1 = arith.extui %0 : i1 to i32
    %c0_i32_0 = arith.constant 0 : i32
    %2 = arith.cmpi ne, %1, %c0_i32_0 : i32
    scf.if %2 {
      %c0_50 = arith.constant 0 : index
      %c0_51 = arith.constant 0 : index
      %184 = vector.load %arg2[%c0_50, %c0_51] : memref<4x32xf32, #tpu.memory_space<vmem>>, vector<4x32xf32>
      %c0_52 = arith.constant 0 : index
      %c0_53 = arith.constant 0 : index
      %185 = vector.load %arg9[%c0_52, %c0_53] : memref<4x32xf32, #tpu.memory_space<vmem>>, vector<4x32xf32>
      tpu.vector_store %arg9[%c0_52, %c0_53], %184 {strides = array<i32>} : memref<4x32xf32, #tpu.memory_space<vmem>>, vector<4x32xf32>,
    } else {
    }
    %c0 = arith.constant 0 : index
    %c0_1 = arith.constant 0 : index
    %3 = vector.load %arg5[%c0, %c0_1] : memref<32x96xbf16, #tpu.memory_space<vmem>>, vector<32x96xbf16>
    %c0_2 = arith.constant 0 : index
    %c0_3 = arith.constant 0 : index
    %4 = vector.load %arg6[%c0_2, %c0_3] : memref<1x32xf32, #tpu.memory_space<vmem>>, vector<1x32xf32>
    %5 = vector.shape_cast %4 : vector<1x32xf32> to vector<1x32xf32>
    %6 = vector.broadcast %5 : vector<1x32xf32> to vector<4x32xf32>
    %c0_4 = arith.constant 0 : index
    %c0_5 = arith.constant 0 : index
    %7 = vector.load %arg9[%c0_4, %c0_5] : memref<4x32xf32, #tpu.memory_space<vmem>>, vector<4x32xf32>
    %c0_i32_6 = arith.constant 0 : i32
    %8 = arith.index_cast %c0_i32_6 : i32 to index
    %c0_7 = arith.constant 0 : index
    %c0_8 = arith.constant 0 : index
    %9 = vector.load %arg4[%8, %c0_7, %c0_8] : memref<4x4x1xbf16, #tpu.memory_space<vmem>>, vector<1x4x1xbf16>
    %10 = vector.shape_cast %9 : vector<1x4x1xbf16> to vector<4x1xbf16>
    %11 = arith.extf %10 : vector<4x1xbf16> to vector<4x1xf32>
    %12 = vector.broadcast %11 : vector<4x1xf32> to vector<4x32xf32>
    %13 = arith.mulf %7, %12 : vector<4x32xf32>
    %14 = arith.index_cast %c0_i32_6 : i32 to index
    %c0_9 = arith.constant 0 : index
    %c0_10 = arith.constant 0 : index
    %15 = vector.load %arg3[%14, %c0_9, %c0_10] : memref<4x4x96xbf16, #tpu.memory_space<vmem>>, vector<1x4x96xbf16>
    %16 = vector.shape_cast %15 : vector<1x4x96xbf16> to vector<4x96xbf16>
    %17 = arith.extf %16 : vector<4x96xbf16> to vector<4x96xf32>
    %18 = arith.truncf %13 : vector<4x32xf32> to vector<4x32xbf16>
    %cst = arith.constant dense<0.000000e+00> : vector<4x96xf32>
    %19 = tpu.matmul %18, %3, %cst {dimension_numbers = #tpu.dot_dimension_numbers<[1], [0], [0], [1], [0, 0, 1, 1], [], []>} : vector<4x32xbf16>, vector<32x96xbf16>, vector<4x96xf32> -> vector<4x96xf32>
    %20 = vector.extract_strided_slice %17 {offsets = [0, 0], sizes = [4, 32], strides = [1, 1]} : vector<4x96xf32> to vector<4x32xf32>
    %21 = vector.extract_strided_slice %19 {offsets = [0, 0], sizes = [4, 32], strides = [1, 1]} : vector<4x96xf32> to vector<4x32xf32>
    %22 = arith.addf %20, %21 : vector<4x32xf32>
    %23 = arith.negf %22 : vector<4x32xf32>
    %24 = math.exp %23 : vector<4x32xf32>
    %cst_11 = arith.constant 1.000000e+00 : f32
    %25 = vector.broadcast %cst_11 : f32 to vector<4x32xf32>
    %26 = arith.addf %25, %24 : vector<4x32xf32>
    %27 = arith.divf %25, %26 : vector<4x32xf32>
    %28 = vector.extract_strided_slice %17 {offsets = [0, 32], sizes = [4, 32], strides = [1, 1]} : vector<4x96xf32> to vector<4x32xf32>
    %29 = vector.extract_strided_slice %19 {offsets = [0, 32], sizes = [4, 32], strides = [1, 1]} : vector<4x96xf32> to vector<4x32xf32>
    %30 = arith.addf %28, %29 : vector<4x32xf32>
    %31 = arith.negf %30 : vector<4x32xf32>
    %32 = math.exp %31 : vector<4x32xf32>
    %cst_12 = arith.constant 1.000000e+00 : f32
    %33 = vector.broadcast %cst_12 : f32 to vector<4x32xf32>
    %34 = arith.addf %33, %32 : vector<4x32xf32>
    %35 = arith.divf %33, %34 : vector<4x32xf32>
    %36 = vector.extract_strided_slice %17 {offsets = [0, 64], sizes = [4, 32], strides = [1, 1]} : vector<4x96xf32> to vector<4x32xf32>
    %37 = vector.extract_strided_slice %19 {offsets = [0, 64], sizes = [4, 32], strides = [1, 1]} : vector<4x96xf32> to vector<4x32xf32>
    %38 = arith.addf %37, %6 : vector<4x32xf32>
    %39 = arith.mulf %27, %38 : vector<4x32xf32>
    %40 = arith.addf %36, %39 : vector<4x32xf32>
    %41 = math.tanh %40 : vector<4x32xf32>
    %cst_13 = arith.constant 1.000000e+00 : f32
    %42 = vector.broadcast %cst_13 : f32 to vector<4x32xf32>
    %43 = arith.subf %42, %35 : vector<4x32xf32>
    %44 = arith.mulf %43, %41 : vector<4x32xf32>
    %45 = arith.mulf %35, %13 : vector<4x32xf32>
    %46 = arith.addf %44, %45 : vector<4x32xf32>
    %47 = arith.index_cast %c0_i32_6 : i32 to index
    %c0_14 = arith.constant 0 : index
    %c0_15 = arith.constant 0 : index
    %48 = vector.load %arg7[%47, %c0_14, %c0_15] : memref<4x4x32xf32, #tpu.memory_space<vmem>>, vector<1x4x32xf32>
    %49 = vector.shape_cast %48 : vector<1x4x32xf32> to vector<4x32xf32>
    %50 = vector.shape_cast %46 : vector<4x32xf32> to vector<1x4x32xf32>
    tpu.vector_store %arg7[%47, %c0_14, %c0_15], %50 {strides = array<i32>} : memref<4x4x32xf32, #tpu.memory_space<vmem>>, vector<1x4x32xf32>,
    %c1_i32 = arith.constant 1 : i32
    %51 = arith.index_cast %c1_i32 : i32 to index
    %c0_16 = arith.constant 0 : index
    %c0_17 = arith.constant 0 : index
    %52 = vector.load %arg4[%51, %c0_16, %c0_17] : memref<4x4x1xbf16, #tpu.memory_space<vmem>>, vector<1x4x1xbf16>
    %53 = vector.shape_cast %52 : vector<1x4x1xbf16> to vector<4x1xbf16>
    %54 = arith.extf %53 : vector<4x1xbf16> to vector<4x1xf32>
    %55 = vector.broadcast %54 : vector<4x1xf32> to vector<4x32xf32>
    %56 = arith.mulf %46, %55 : vector<4x32xf32>
    %57 = arith.index_cast %c1_i32 : i32 to index
    %c0_18 = arith.constant 0 : index
    %c0_19 = arith.constant 0 : index
    %58 = vector.load %arg3[%57, %c0_18, %c0_19] : memref<4x4x96xbf16, #tpu.memory_space<vmem>>, vector<1x4x96xbf16>
    %59 = vector.shape_cast %58 : vector<1x4x96xbf16> to vector<4x96xbf16>
    %60 = arith.extf %59 : vector<4x96xbf16> to vector<4x96xf32>
    %61 = arith.truncf %56 : vector<4x32xf32> to vector<4x32xbf16>
    %cst_20 = arith.constant dense<0.000000e+00> : vector<4x96xf32>
    %62 = tpu.matmul %61, %3, %cst_20 {dimension_numbers = #tpu.dot_dimension_numbers<[1], [0], [0], [1], [0, 0, 1, 1], [], []>} : vector<4x32xbf16>, vector<32x96xbf16>, vector<4x96xf32> -> vector<4x96xf32>
    %63 = vector.extract_strided_slice %60 {offsets = [0, 0], sizes = [4, 32], strides = [1, 1]} : vector<4x96xf32> to vector<4x32xf32>
    %64 = vector.extract_strided_slice %62 {offsets = [0, 0], sizes = [4, 32], strides = [1, 1]} : vector<4x96xf32> to vector<4x32xf32>
    %65 = arith.addf %63, %64 : vector<4x32xf32>
    %66 = arith.negf %65 : vector<4x32xf32>
    %67 = math.exp %66 : vector<4x32xf32>
    %cst_21 = arith.constant 1.000000e+00 : f32
    %68 = vector.broadcast %cst_21 : f32 to vector<4x32xf32>
    %69 = arith.addf %68, %67 : vector<4x32xf32>
    %70 = arith.divf %68, %69 : vector<4x32xf32>
    %71 = vector.extract_strided_slice %60 {offsets = [0, 32], sizes = [4, 32], strides = [1, 1]} : vector<4x96xf32> to vector<4x32xf32>
    %72 = vector.extract_strided_slice %62 {offsets = [0, 32], sizes = [4, 32], strides = [1, 1]} : vector<4x96xf32> to vector<4x32xf32>
    %73 = arith.addf %71, %72 : vector<4x32xf32>
    %74 = arith.negf %73 : vector<4x32xf32>
    %75 = math.exp %74 : vector<4x32xf32>
    %cst_22 = arith.constant 1.000000e+00 : f32
    %76 = vector.broadcast %cst_22 : f32 to vector<4x32xf32>
    %77 = arith.addf %76, %75 : vector<4x32xf32>
    %78 = arith.divf %76, %77 : vector<4x32xf32>
    %79 = vector.extract_strided_slice %60 {offsets = [0, 64], sizes = [4, 32], strides = [1, 1]} : vector<4x96xf32> to vector<4x32xf32>
    %80 = vector.extract_strided_slice %62 {offsets = [0, 64], sizes = [4, 32], strides = [1, 1]} : vector<4x96xf32> to vector<4x32xf32>
    %81 = arith.addf %80, %6 : vector<4x32xf32>
    %82 = arith.mulf %70, %81 : vector<4x32xf32>
    %83 = arith.addf %79, %82 : vector<4x32xf32>
    %84 = math.tanh %83 : vector<4x32xf32>
    %cst_23 = arith.constant 1.000000e+00 : f32
    %85 = vector.broadcast %cst_23 : f32 to vector<4x32xf32>
    %86 = arith.subf %85, %78 : vector<4x32xf32>
    %87 = arith.mulf %86, %84 : vector<4x32xf32>
    %88 = arith.mulf %78, %56 : vector<4x32xf32>
    %89 = arith.addf %87, %88 : vector<4x32xf32>
    %90 = arith.index_cast %c1_i32 : i32 to index
    %c0_24 = arith.constant 0 : index
    %c0_25 = arith.constant 0 : index
    %91 = vector.load %arg7[%90, %c0_24, %c0_25] : memref<4x4x32xf32, #tpu.memory_space<vmem>>, vector<1x4x32xf32>
    %92 = vector.shape_cast %91 : vector<1x4x32xf32> to vector<4x32xf32>
    %93 = vector.shape_cast %89 : vector<4x32xf32> to vector<1x4x32xf32>
    tpu.vector_store %arg7[%90, %c0_24, %c0_25], %93 {strides = array<i32>} : memref<4x4x32xf32, #tpu.memory_space<vmem>>, vector<1x4x32xf32>,
    %c2_i32 = arith.constant 2 : i32
    %94 = arith.index_cast %c2_i32 : i32 to index
    %c0_26 = arith.constant 0 : index
    %c0_27 = arith.constant 0 : index
    %95 = vector.load %arg4[%94, %c0_26, %c0_27] : memref<4x4x1xbf16, #tpu.memory_space<vmem>>, vector<1x4x1xbf16>
    %96 = vector.shape_cast %95 : vector<1x4x1xbf16> to vector<4x1xbf16>
    %97 = arith.extf %96 : vector<4x1xbf16> to vector<4x1xf32>
    %98 = vector.broadcast %97 : vector<4x1xf32> to vector<4x32xf32>
    %99 = arith.mulf %89, %98 : vector<4x32xf32>
    %100 = arith.index_cast %c2_i32 : i32 to index
    %c0_28 = arith.constant 0 : index
    %c0_29 = arith.constant 0 : index
    %101 = vector.load %arg3[%100, %c0_28, %c0_29] : memref<4x4x96xbf16, #tpu.memory_space<vmem>>, vector<1x4x96xbf16>
    %102 = vector.shape_cast %101 : vector<1x4x96xbf16> to vector<4x96xbf16>
    %103 = arith.extf %102 : vector<4x96xbf16> to vector<4x96xf32>
    %104 = arith.truncf %99 : vector<4x32xf32> to vector<4x32xbf16>
    %cst_30 = arith.constant dense<0.000000e+00> : vector<4x96xf32>
    %105 = tpu.matmul %104, %3, %cst_30 {dimension_numbers = #tpu.dot_dimension_numbers<[1], [0], [0], [1], [0, 0, 1, 1], [], []>} : vector<4x32xbf16>, vector<32x96xbf16>, vector<4x96xf32> -> vector<4x96xf32>
    %106 = vector.extract_strided_slice %103 {offsets = [0, 0], sizes = [4, 32], strides = [1, 1]} : vector<4x96xf32> to vector<4x32xf32>
    %107 = vector.extract_strided_slice %105 {offsets = [0, 0], sizes = [4, 32], strides = [1, 1]} : vector<4x96xf32> to vector<4x32xf32>
    %108 = arith.addf %106, %107 : vector<4x32xf32>
    %109 = arith.negf %108 : vector<4x32xf32>
    %110 = math.exp %109 : vector<4x32xf32>
    %cst_31 = arith.constant 1.000000e+00 : f32
    %111 = vector.broadcast %cst_31 : f32 to vector<4x32xf32>
    %112 = arith.addf %111, %110 : vector<4x32xf32>
    %113 = arith.divf %111, %112 : vector<4x32xf32>
    %114 = vector.extract_strided_slice %103 {offsets = [0, 32], sizes = [4, 32], strides = [1, 1]} : vector<4x96xf32> to vector<4x32xf32>
    %115 = vector.extract_strided_slice %105 {offsets = [0, 32], sizes = [4, 32], strides = [1, 1]} : vector<4x96xf32> to vector<4x32xf32>
    %116 = arith.addf %114, %115 : vector<4x32xf32>
    %117 = arith.negf %116 : vector<4x32xf32>
    %118 = math.exp %117 : vector<4x32xf32>
    %cst_32 = arith.constant 1.000000e+00 : f32
    %119 = vector.broadcast %cst_32 : f32 to vector<4x32xf32>
    %120 = arith.addf %119, %118 : vector<4x32xf32>
    %121 = arith.divf %119, %120 : vector<4x32xf32>
    %122 = vector.extract_strided_slice %103 {offsets = [0, 64], sizes = [4, 32], strides = [1, 1]} : vector<4x96xf32> to vector<4x32xf32>
    %123 = vector.extract_strided_slice %105 {offsets = [0, 64], sizes = [4, 32], strides = [1, 1]} : vector<4x96xf32> to vector<4x32xf32>
    %124 = arith.addf %123, %6 : vector<4x32xf32>
    %125 = arith.mulf %113, %124 : vector<4x32xf32>
    %126 = arith.addf %122, %125 : vector<4x32xf32>
    %127 = math.tanh %126 : vector<4x32xf32>
    %cst_33 = arith.constant 1.000000e+00 : f32
    %128 = vector.broadcast %cst_33 : f32 to vector<4x32xf32>
    %129 = arith.subf %128, %121 : vector<4x32xf32>
    %130 = arith.mulf %129, %127 : vector<4x32xf32>
    %131 = arith.mulf %121, %99 : vector<4x32xf32>
    %132 = arith.addf %130, %131 : vector<4x32xf32>
    %133 = arith.index_cast %c2_i32 : i32 to index
    %c0_34 = arith.constant 0 : index
    %c0_35 = arith.constant 0 : index
    %134 = vector.load %arg7[%133, %c0_34, %c0_35] : memref<4x4x32xf32, #tpu.memory_space<vmem>>, vector<1x4x32xf32>
    %135 = vector.shape_cast %134 : vector<1x4x32xf32> to vector<4x32xf32>
    %136 = vector.shape_cast %132 : vector<4x32xf32> to vector<1x4x32xf32>
    tpu.vector_store %arg7[%133, %c0_34, %c0_35], %136 {strides = array<i32>} : memref<4x4x32xf32, #tpu.memory_space<vmem>>, vector<1x4x32xf32>,
    %c3_i32 = arith.constant 3 : i32
    %137 = arith.index_cast %c3_i32 : i32 to index
    %c0_36 = arith.constant 0 : index
    %c0_37 = arith.constant 0 : index
    %138 = vector.load %arg4[%137, %c0_36, %c0_37] : memref<4x4x1xbf16, #tpu.memory_space<vmem>>, vector<1x4x1xbf16>
    %139 = vector.shape_cast %138 : vector<1x4x1xbf16> to vector<4x1xbf16>
    %140 = arith.extf %139 : vector<4x1xbf16> to vector<4x1xf32>
    %141 = vector.broadcast %140 : vector<4x1xf32> to vector<4x32xf32>
    %142 = arith.mulf %132, %141 : vector<4x32xf32>
    %143 = arith.index_cast %c3_i32 : i32 to index
    %c0_38 = arith.constant 0 : index
    %c0_39 = arith.constant 0 : index
    %144 = vector.load %arg3[%143, %c0_38, %c0_39] : memref<4x4x96xbf16, #tpu.memory_space<vmem>>, vector<1x4x96xbf16>
    %145 = vector.shape_cast %144 : vector<1x4x96xbf16> to vector<4x96xbf16>
    %146 = arith.extf %145 : vector<4x96xbf16> to vector<4x96xf32>
    %147 = arith.truncf %142 : vector<4x32xf32> to vector<4x32xbf16>
    %cst_40 = arith.constant dense<0.000000e+00> : vector<4x96xf32>
    %148 = tpu.matmul %147, %3, %cst_40 {dimension_numbers = #tpu.dot_dimension_numbers<[1], [0], [0], [1], [0, 0, 1, 1], [], []>} : vector<4x32xbf16>, vector<32x96xbf16>, vector<4x96xf32> -> vector<4x96xf32>
    %149 = vector.extract_strided_slice %146 {offsets = [0, 0], sizes = [4, 32], strides = [1, 1]} : vector<4x96xf32> to vector<4x32xf32>
    %150 = vector.extract_strided_slice %148 {offsets = [0, 0], sizes = [4, 32], strides = [1, 1]} : vector<4x96xf32> to vector<4x32xf32>
    %151 = arith.addf %149, %150 : vector<4x32xf32>
    %152 = arith.negf %151 : vector<4x32xf32>
    %153 = math.exp %152 : vector<4x32xf32>
    %cst_41 = arith.constant 1.000000e+00 : f32
    %154 = vector.broadcast %cst_41 : f32 to vector<4x32xf32>
    %155 = arith.addf %154, %153 : vector<4x32xf32>
    %156 = arith.divf %154, %155 : vector<4x32xf32>
    %157 = vector.extract_strided_slice %146 {offsets = [0, 32], sizes = [4, 32], strides = [1, 1]} : vector<4x96xf32> to vector<4x32xf32>
    %158 = vector.extract_strided_slice %148 {offsets = [0, 32], sizes = [4, 32], strides = [1, 1]} : vector<4x96xf32> to vector<4x32xf32>
    %159 = arith.addf %157, %158 : vector<4x32xf32>
    %160 = arith.negf %159 : vector<4x32xf32>
    %161 = math.exp %160 : vector<4x32xf32>
    %cst_42 = arith.constant 1.000000e+00 : f32
    %162 = vector.broadcast %cst_42 : f32 to vector<4x32xf32>
    %163 = arith.addf %162, %161 : vector<4x32xf32>
    %164 = arith.divf %162, %163 : vector<4x32xf32>
    %165 = vector.extract_strided_slice %146 {offsets = [0, 64], sizes = [4, 32], strides = [1, 1]} : vector<4x96xf32> to vector<4x32xf32>
    %166 = vector.extract_strided_slice %148 {offsets = [0, 64], sizes = [4, 32], strides = [1, 1]} : vector<4x96xf32> to vector<4x32xf32>
    %167 = arith.addf %166, %6 : vector<4x32xf32>
    %168 = arith.mulf %156, %167 : vector<4x32xf32>
    %169 = arith.addf %165, %168 : vector<4x32xf32>
    %170 = math.tanh %169 : vector<4x32xf32>
    %cst_43 = arith.constant 1.000000e+00 : f32
    %171 = vector.broadcast %cst_43 : f32 to vector<4x32xf32>
    %172 = arith.subf %171, %164 : vector<4x32xf32>
    %173 = arith.mulf %172, %170 : vector<4x32xf32>
    %174 = arith.mulf %164, %142 : vector<4x32xf32>
    %175 = arith.addf %173, %174 : vector<4x32xf32>
    %176 = arith.index_cast %c3_i32 : i32 to index
    %c0_44 = arith.constant 0 : index
    %c0_45 = arith.constant 0 : index
    %177 = vector.load %arg7[%176, %c0_44, %c0_45] : memref<4x4x32xf32, #tpu.memory_space<vmem>>, vector<1x4x32xf32>
    %178 = vector.shape_cast %177 : vector<1x4x32xf32> to vector<4x32xf32>
    %179 = vector.shape_cast %175 : vector<4x32xf32> to vector<1x4x32xf32>
    tpu.vector_store %arg7[%176, %c0_44, %c0_45], %179 {strides = array<i32>} : memref<4x4x32xf32, #tpu.memory_space<vmem>>, vector<1x4x32xf32>,
    %c4_i32 = arith.constant 4 : i32
    %c0_46 = arith.constant 0 : index
    %c0_47 = arith.constant 0 : index
    %180 = vector.load %arg9[%c0_46, %c0_47] : memref<4x32xf32, #tpu.memory_space<vmem>>, vector<4x32xf32>
    tpu.vector_store %arg9[%c0_46, %c0_47], %175 {strides = array<i32>} : memref<4x32xf32, #tpu.memory_space<vmem>>, vector<4x32xf32>,
    %c1_i32_48 = arith.constant 1 : i32
    %181 = arith.cmpi eq, %arg1, %c1_i32_48 : i32
    %182 = arith.extui %181 : i1 to i32
    %c0_i32_49 = arith.constant 0 : i32
    %183 = arith.cmpi ne, %182, %c0_i32_49 : i32
    scf.if %183 {
      %c0_50 = arith.constant 0 : index
      %c0_51 = arith.constant 0 : index
      %184 = vector.load %arg8[%c0_50, %c0_51] : memref<4x32xf32, #tpu.memory_space<vmem>>, vector<4x32xf32>
      tpu.vector_store %arg8[%c0_50, %c0_51], %175 {strides = array<i32>} : memref<4x32xf32, #tpu.memory_space<vmem>>, vector<4x32xf32>,
    } else {
    }
    return
  }
  func.func @transform_0(%arg0: i32, %arg1: i32) -> (i32, i32) {
    %c0_i32 = arith.constant 0 : i32
    %c0_i32_0 = arith.constant 0 : i32
    return %arg0, %c0_i32 : i32, i32
  }
  func.func @transform_1(%arg0: i32, %arg1: i32) -> (i32, i32, i32) {
    %c0_i32 = arith.constant 0 : i32
    %c0_i32_0 = arith.constant 0 : i32
    return %arg1, %arg0, %c0_i32 : i32, i32, i32
  }
  func.func @transform_2(%arg0: i32, %arg1: i32) -> (i32, i32, i32) {
    %c0_i32 = arith.constant 0 : i32
    %c0_i32_0 = arith.constant 0 : i32
    return %arg1, %arg0, %c0_i32 : i32, i32, i32
  }
  func.func @transform_3(%arg0: i32, %arg1: i32) -> (i32, i32) {
    %c0_i32 = arith.constant 0 : i32
    %c0_i32_0 = arith.constant 0 : i32
    %c0_i32_1 = arith.constant 0 : i32
    return %c0_i32, %c0_i32_0 : i32, i32
  }
  func.func @transform_4(%arg0: i32, %arg1: i32) -> (i32, i32) {
    %c0_i32 = arith.constant 0 : i32
    %c0_i32_0 = arith.constant 0 : i32
    %c0_i32_1 = arith.constant 0 : i32
    return %c0_i32, %c0_i32_0 : i32, i32
  }
  func.func @transform_5(%arg0: i32, %arg1: i32) -> (i32, i32, i32) {
    %c0_i32 = arith.constant 0 : i32
    %c0_i32_0 = arith.constant 0 : i32
    return %arg1, %arg0, %c0_i32 : i32, i32, i32
  }
  func.func @transform_6(%arg0: i32, %arg1: i32) -> (i32, i32) {
    %c0_i32 = arith.constant 0 : i32
    %c0_i32_0 = arith.constant 0 : i32
    return %arg0, %c0_i32 : i32, i32
  }
}

</mosaic_0001>

<llo_original>
// kernel: tpu_custom_call.1
$region0: #{tpu_custom_call.1}
  #allocation0 [shape = 'u32[]', space=smem, size = 0x4, offset = 0x4, fixed_abs, tag = 'smem constant byte address 0x4 - core index']
  #allocation1 [shape = 'u32[144,128]{1,0:T(1,128)}', space=vmem, size = 0x12000, scoped, tag = 'internal scratch']
  #allocation2 [shape = 'f32[4,32]{1,0:T(4,128)}', space=vmem, size = 0x800, scoped, tag = 'scratch operand']
  %s0 = inlined_call_operand.hbm [shape: f32[4,32], index: 0, kind: input, shape index: {}]
  %s1 = inlined_call_operand.vmem [shape: bf16[8,4,96], index: 1, kind: input, shape index: {}]
  %s2 = inlined_call_operand.vmem [shape: bf16[8,4,1], index: 2, kind: input, shape index: {}]
  %s3 = inlined_call_operand.hbm [shape: bf16[32,96], index: 3, kind: input, shape index: {}]
  %s4 = inlined_call_operand.vmem [shape: f32[1,32], index: 4, kind: input, shape index: {}]
  %s5 = inlined_call_operand.hbm [shape: f32[8,4,32], index: 5, kind: output, shape index: {0}]
  %s6 = inlined_call_operand.hbm [shape: f32[4,32], index: 6, kind: output, shape index: {1}]
  %7 = xla_tuple %s5, %s6
  %s8 = sld [smem:[#allocation0]]
  $region77: #{tpu_custom_call.1} parent=0
    _
  %s10 = ssub.s32 1, %s8
  %s11 = scalar_select 0, %s10, %s8
  $region1: #{tpu_custom_call.1} parent=0
    #allocation3 [shape = 'u8[2048]{0}', space=vmem, size = 0x800, scoped, tag = 'input window, operand 0, single buffered']
    #allocation4 [shape = 's32[2]{0}', space=sflag, size = 0x8, scoped, tag = 'scoped memory for tpu_custom_call.1']
    #allocation5 [shape = 's32[2]{0}', space=sflag, size = 0x8, scoped, tag = 'scoped memory for tpu_custom_call.1']
    #allocation6 [shape = 'u8[8192]{0}', space=vmem, size = 0x2000, scoped, tag = 'input window, operand 3, single buffered']
    #allocation7 [shape = 's32[1]{0}', space=sflag, size = 0x4, scoped, tag = 'scoped memory for tpu_custom_call.1']
    #allocation8 [shape = 'u8[16384]{0}', space=vmem, size = 0x4000, scoped, tag = 'output window, operand 0']
    #allocation9 [shape = 'u8[2048]{0}', space=vmem, size = 0x800, scoped, tag = 'output window, operand 1, single buffered']
    #allocation10 [shape = 's32[1]{0}', space=sflag, size = 0x4, scoped, tag = 'scoped memory for tpu_custom_call.1']
    %12 = vsyncpa [#allocation4], 0
    %13 = vsyncpa [#allocation7], 0
    %14 = vsyncpa [#allocation5], 0
    %s15 = scalar_lea.sflag [#allocation5], 1
    %16 = vsyncpa %s15, 0
    %17 = vsyncpa [#allocation10], 0
    loop: start=0, step=1, limit=4
    $region2: #{tpu_custom_call.1} parent=1 // loop_pre_header
      _
    $region3: #{tpu_custom_call.1} parent=1 // loop_header
      %s19 = sphi 0, %s23
      %p20 = scmp.ge.s32.totalorder %s19, 4
      %s26 = sphi 0, %s38
      %s27 = sphi 0, %s34
      %s28 = sphi 0, %s26
      %s29 = sphi 0, %s27
      %s30 = sphi 0, %s28
      %s31 = sphi 0, %s29
      %s41 = sphi 0, %s43
      %s44 = sphi 0, %s41
      %s45 = sphi 0, %s44
      %s61 = sphi 0, %s45
      %s69 = sphi 0, %s71
      %s72 = sphi 0, %s69
      %s73 = sphi 0, %s72
      %s89 = sphi 0, %s73
      %s97 = sphi 0, %s99
      %s100 = sphi 0, %s97
      %s101 = sphi 0, %s100
      %s117 = sphi 0, %s101
      %s121 = sphi 0, %s121
      %s123 = sphi 0, %s121
      %s124 = sphi 0, %s123
      %s138 = sphi 0, %s124
      %s142 = sphi 0, %s142
      %s144 = sphi 0, %s142
      %s145 = sphi 0, %s144
      %s159 = sphi 0, %s145
      %s167 = sphi 0, %s169
      %s170 = sphi 0, %s167
      %s171 = sphi 0, %s170
      %s187 = sphi 0, %s171
      %s193 = sphi 0, %s195
      %s196 = sphi 0, %s193
      %s197 = sphi 0, %s196
      %s213 = sphi 0, %s197
    $region4: #{tpu_custom_call.1} parent=1 // loop_header_branch
      %22 = sbr.rel (%p20) target = $region8
    $region5: #{tpu_custom_call.1} parent=1 // loop_body
      %s24 = ssub.s32 %s19, 1
      %s25 = ssub.s32 %s19, 2
      %s32 = sadd.s32 1, %s27
      %p33 = scmp.ge.s32.totalorder %s32, 2
      %s34 = scalar_select %p33, 0, %s32
      %s35 = sadd.s32 1, %s26
      %s36 = scalar_select %p33, %s35, %s26
      %p37 = scmp.ge.s32.totalorder %s36, 1
      %s38 = scalar_select %p37, 0, %s36
      %s39 = ssub.s32 %s26, %s38
      %p40 = scmp.eq.s32.totalorder %s39, 0
      %s42 = sadd.s32 %s41, 1
      %s43 = scalar_select %p40, %s41, %s42
      %p46 = pneg %p40
      %p47 = scmp.eq.s32.totalorder %s19, 1
      %p48 = por %p46, %p47
      %p49 = scmp.ne.s32.totalorder %s41, %s44
      %p50 = scmp.eq.s32.totalorder %s19, 0
      %p51 = por %p49, %p50
      %p52 = scmp.ne.s32.totalorder %s41, %s44
      %p53 = scmp.eq.s32.totalorder %s24, 1
      %p54 = por %p52, %p53
      %p55 = scmp.ne.s32.totalorder %s44, %s45
      %p56 = scmp.eq.s32.totalorder %s24, 0
      %p57 = por %p55, %p56
      %p58 = scmp.ne.s32.totalorder %s44, %s45
      %p59 = scmp.eq.s32.totalorder %s25, 1
      %p60 = por %p58, %p59
      %p62 = scmp.ne.s32.totalorder %s45, %s61
      %p63 = scmp.eq.s32.totalorder %s25, 0
      %p64 = por %p62, %p63
      %s65 = ssub.s32 %s27, %s34
      %s66 = ssub.s32 %s26, %s38
      %s67 = sor.u32 %s65, %s66
      %p68 = scmp.eq.s32.totalorder %s67, 0
      %s70 = sadd.s32 %s69, 1
      %s71 = scalar_select %p68, %s69, %s70
      %p74 = pneg %p68
      %p75 = scmp.eq.s32.totalorder %s19, 1
      %p76 = por %p74, %p75
      %p77 = scmp.ne.s32.totalorder %s69, %s72
      %p78 = scmp.eq.s32.totalorder %s19, 0
      %p79 = por %p77, %p78
      %p80 = scmp.ne.s32.totalorder %s69, %s72
      %p81 = scmp.eq.s32.totalorder %s24, 1
      %p82 = por %p80, %p81
      %p83 = scmp.ne.s32.totalorder %s72, %s73
      %p84 = scmp.eq.s32.totalorder %s24, 0
      %p85 = por %p83, %p84
      %p86 = scmp.ne.s32.totalorder %s72, %s73
      %p87 = scmp.eq.s32.totalorder %s25, 1
      %p88 = por %p86, %p87
      %p90 = scmp.ne.s32.totalorder %s73, %s89
      %p91 = scmp.eq.s32.totalorder %s25, 0
      %p92 = por %p90, %p91
      %s93 = ssub.s32 %s27, %s34
      %s94 = ssub.s32 %s26, %s38
      %s95 = sor.u32 %s93, %s94
      %p96 = scmp.eq.s32.totalorder %s95, 0
      %s98 = sadd.s32 %s97, 1
      %s99 = scalar_select %p96, %s97, %s98
      %p102 = pneg %p96
      %p103 = scmp.eq.s32.totalorder %s19, 1
      %p104 = por %p102, %p103
      %p105 = scmp.ne.s32.totalorder %s97, %s100
      %p106 = scmp.eq.s32.totalorder %s19, 0
      %p107 = por %p105, %p106
      %p108 = scmp.ne.s32.totalorder %s97, %s100
      %p109 = scmp.eq.s32.totalorder %s24, 1
      %p110 = por %p108, %p109
      %p111 = scmp.ne.s32.totalorder %s100, %s101
      %p112 = scmp.eq.s32.totalorder %s24, 0
      %p113 = por %p111, %p112
      %p114 = scmp.ne.s32.totalorder %s100, %s101
      %p115 = scmp.eq.s32.totalorder %s25, 1
      %p116 = por %p114, %p115
      %p118 = scmp.ne.s32.totalorder %s101, %s117
      %p119 = scmp.eq.s32.totalorder %s25, 0
      %p120 = por %p118, %p119
      %s122 = sadd.s32 %s121, 1
      %p125 = scmp.eq.s32.totalorder %s19, 1
      %p126 = scmp.ne.s32.totalorder %s121, %s123
      %p127 = scmp.eq.s32.totalorder %s19, 0
      %p128 = por %p126, %p127
      %p129 = scmp.ne.s32.totalorder %s121, %s123
      %p130 = scmp.eq.s32.totalorder %s24, 1
      %p131 = por %p129, %p130
      %p132 = scmp.ne.s32.totalorder %s123, %s124
      %p133 = scmp.eq.s32.totalorder %s24, 0
      %p134 = por %p132, %p133
      %p135 = scmp.ne.s32.totalorder %s123, %s124
      %p136 = scmp.eq.s32.totalorder %s25, 1
      %p137 = por %p135, %p136
      %p139 = scmp.ne.s32.totalorder %s124, %s138
      %p140 = scmp.eq.s32.totalorder %s25, 0
      %p141 = por %p139, %p140
      %s143 = sadd.s32 %s142, 1
      %p146 = scmp.eq.s32.totalorder %s19, 1
      %p147 = scmp.ne.s32.totalorder %s142, %s144
      %p148 = scmp.eq.s32.totalorder %s19, 0
      %p149 = por %p147, %p148
      %p150 = scmp.ne.s32.totalorder %s142, %s144
      %p151 = scmp.eq.s32.totalorder %s24, 1
      %p152 = por %p150, %p151
      %p153 = scmp.ne.s32.totalorder %s144, %s145
      %p154 = scmp.eq.s32.totalorder %s24, 0
      %p155 = por %p153, %p154
      %p156 = scmp.ne.s32.totalorder %s144, %s145
      %p157 = scmp.eq.s32.totalorder %s25, 1
      %p158 = por %p156, %p157
      %p160 = scmp.ne.s32.totalorder %s145, %s159
      %p161 = scmp.eq.s32.totalorder %s25, 0
      %p162 = por %p160, %p161
      %s163 = ssub.s32 %s27, %s34
      %s164 = ssub.s32 %s26, %s38
      %s165 = sor.u32 %s163, %s164
      %p166 = scmp.eq.s32.totalorder %s165, 0
      %s168 = sadd.s32 %s167, 1
      %s169 = scalar_select %p166, %s167, %s168
      %p172 = pneg %p166
      %p173 = scmp.eq.s32.totalorder %s19, 1
      %p174 = por %p172, %p173
      %p175 = scmp.ne.s32.totalorder %s167, %s170
      %p176 = scmp.eq.s32.totalorder %s19, 0
      %p177 = por %p175, %p176
      %p178 = scmp.ne.s32.totalorder %s167, %s170
      %p179 = scmp.eq.s32.totalorder %s24, 1
      %p180 = por %p178, %p179
      %p181 = scmp.ne.s32.totalorder %s170, %s171
      %p182 = scmp.eq.s32.totalorder %s24, 0
      %p183 = por %p181, %p182
      %p184 = scmp.ne.s32.totalorder %s170, %s171
      %p185 = scmp.eq.s32.totalorder %s25, 1
      %p186 = por %p184, %p185
      %p188 = scmp.ne.s32.totalorder %s171, %s187
      %p189 = scmp.eq.s32.totalorder %s25, 0
      %p190 = por %p188, %p189
      %s191 = ssub.s32 %s26, %s38
      %p192 = scmp.eq.s32.totalorder %s191, 0
      %s194 = sadd.s32 %s193, 1
      %s195 = scalar_select %p192, %s193, %s194
      %p198 = pneg %p192
      %p199 = scmp.eq.s32.totalorder %s19, 1
      %p200 = por %p198, %p199
      %p201 = scmp.ne.s32.totalorder %s193, %s196
      %p202 = scmp.eq.s32.totalorder %s19, 0
      %p203 = por %p201, %p202
      %p204 = scmp.ne.s32.totalorder %s193, %s196
      %p205 = scmp.eq.s32.totalorder %s24, 1
      %p206 = por %p204, %p205
      %p207 = scmp.ne.s32.totalorder %s196, %s197
      %p208 = scmp.eq.s32.totalorder %s24, 0
      %p209 = por %p207, %p208
      %p210 = scmp.ne.s32.totalorder %s196, %s197
      %p211 = scmp.eq.s32.totalorder %s25, 1
      %p212 = por %p210, %p211
      %p214 = scmp.ne.s32.totalorder %s197, %s213
      %p215 = scmp.eq.s32.totalorder %s25, 0
      %p216 = por %p214, %p215
      %p217 = scmp.le.s32.totalorder 1, %s19
      %p218 = scmp.lt.s32.totalorder %s19, 3
      %p219 = pnand %p217, %p218
      %p220 = pneg %p219
      // Predicated region
      $region9: #{tpu_custom_call.1} parent=5 // pred_check
        _
      $region10: #{tpu_custom_call.1} parent=5 // pred_check_branch
        %222 = sbr.rel (%p219) target = $region12
      $region11: #{tpu_custom_call.1} parent=5 // pred_region
        %s223 = ssub.s32 %s19, 1
        // Predicated region
        $region13: #{tpu_custom_call.1} parent=11 // pred_check
          %p224 = pneg %p57
        $region14: #{tpu_custom_call.1} parent=11 // pred_check_branch
          %226 = sbr.rel (%p224) target = $region16
        $region15: #{tpu_custom_call.1} parent=11 // pred_region
          %s228 = ssub.s32 64, 64
          %229 = vsyncadd [#allocation4], %s228
          %s230 = smul.addr %s28, 64
          %s231 = scalar_lea.hbm %s0, %s230
          %s233 = sshll.u32 [#allocation3], 4
          %s234 = int_to_ptr.vmem [resolvable:$true] %s233
          %236 = dma.hbm_to_vmem [thread:$0]  %s231, 64, %s234, [#allocation4]
        $region16: #{tpu_custom_call.1} parent=11 // pred_fallthru
          _
        // Predicated region
        $region17: #{tpu_custom_call.1} parent=11 // pred_check
          %p237 = pneg %p134
        $region18: #{tpu_custom_call.1} parent=11 // pred_check_branch
          %239 = sbr.rel (%p237) target = $region20
        $region19: #{tpu_custom_call.1} parent=11 // pred_region
          %s241 = ssub.s32 256, 256
          %242 = vsyncadd [#allocation7], %s241
          %s243 = sshll.u32 [#allocation6], 4
          %s244 = int_to_ptr.vmem [resolvable:$true] %s243
          %249 = dma.hbm_to_vmem [thread:$0]  %s3, 256, %s244, [#allocation7], 64, 64, 4
        $region20: #{tpu_custom_call.1} parent=11 // pred_fallthru
          _
        // Predicated region
        $region21: #{tpu_custom_call.1} parent=11 // pred_check
          %p250 = pneg %p155
        $region22: #{tpu_custom_call.1} parent=11 // pred_check_branch
          %252 = sbr.rel (%p250) target = $region24
        $region23: #{tpu_custom_call.1} parent=11 // pred_region
          _
        $region24: #{tpu_custom_call.1} parent=11 // pred_fallthru
          _
      $region12: #{tpu_custom_call.1} parent=5 // pred_fallthru
        _
      %p253 = scmp.lt.s32.totalorder %s19, 2
      // Predicated region
      $region25: #{tpu_custom_call.1} parent=5 // pred_check
        %p254 = pneg %p253
      $region26: #{tpu_custom_call.1} parent=5 // pred_check_branch
        %256 = sbr.rel (%p254) target = $region28
      $region27: #{tpu_custom_call.1} parent=5 // pred_region
        // Predicated region
        $region29: #{tpu_custom_call.1} parent=27 // pred_check
          %p257 = pneg %p79
        $region30: #{tpu_custom_call.1} parent=27 // pred_check_branch
          %259 = sbr.rel (%p257) target = $region32
        $region31: #{tpu_custom_call.1} parent=27 // pred_region
          %s260 = smul.u32 4, %s27
          %p261 = scmp.lt.s32.totalorder %s260, 7
          %s262 = scalar_select %p261, %s260, 7
          %p263 = scmp.lt.s32.totalorder %s26, 0
          %s264 = scalar_select %p263, %s26, 0
          %s265 = sadd.s32 %s264, %s262
          %s266 = smul.addr %s265, 2
          %s267 = scalar_lea.vmem %s1, %s266
          %s268 = smul.u32 4, %s27
        $region32: #{tpu_custom_call.1} parent=27 // pred_fallthru
          _
        // Predicated region
        $region33: #{tpu_custom_call.1} parent=27 // pred_check
          %p269 = pneg %p107
        $region34: #{tpu_custom_call.1} parent=27 // pred_check_branch
          %271 = sbr.rel (%p269) target = $region36
        $region35: #{tpu_custom_call.1} parent=27 // pred_region
          %s272 = smul.u32 4, %s27
          %p273 = scmp.lt.s32.totalorder %s272, 7
          %s274 = scalar_select %p273, %s272, 7
          %p275 = scmp.lt.s32.totalorder %s26, 0
          %s276 = scalar_select %p275, %s26, 0
          %s277 = sadd.s32 %s276, %s274
          %s278 = smul.addr %s277, 2
          %s279 = scalar_lea.vmem %s2, %s278
          %s280 = smul.u32 4, %s27
        $region36: #{tpu_custom_call.1} parent=27 // pred_fallthru
          _
      $region28: #{tpu_custom_call.1} parent=5 // pred_fallthru
        _
      %p281 = scmp.le.s32.totalorder 1, %s19
      %p282 = scmp.lt.s32.totalorder %s19, 3
      %p283 = pnand %p281, %p282
      %p284 = pneg %p283
      // Predicated region
      $region37: #{tpu_custom_call.1} parent=5 // pred_check
        _
      $region38: #{tpu_custom_call.1} parent=5 // pred_check_branch
        %286 = sbr.rel (%p283) target = $region40
      $region39: #{tpu_custom_call.1} parent=5 // pred_region
        %s287 = ssub.s32 %s19, 1
        // Predicated region
        $region41: #{tpu_custom_call.1} parent=39 // pred_check
          %p288 = pneg %p57
        $region42: #{tpu_custom_call.1} parent=39 // pred_check_branch
          %290 = sbr.rel (%p288) target = $region44
        $region43: #{tpu_custom_call.1} parent=39 // pred_region
          %291 = dma.done [#allocation4], 64
        $region44: #{tpu_custom_call.1} parent=39 // pred_fallthru
          _
        // Predicated region
        $region45: #{tpu_custom_call.1} parent=39 // pred_check
          %p292 = pneg %p134
        $region46: #{tpu_custom_call.1} parent=39 // pred_check_branch
          %294 = sbr.rel (%p292) target = $region48
        $region47: #{tpu_custom_call.1} parent=39 // pred_region
          %295 = dma.done [#allocation7], 256
        $region48: #{tpu_custom_call.1} parent=39 // pred_fallthru
          _
        %p296 = pneg %p57
        %p297 = pneg %p54
        %s298 = smul.u32 4, %s29
        %p299 = scmp.lt.s32.totalorder %s298, 7
        %s300 = scalar_select %p299, %s298, 7
        %p301 = scmp.lt.s32.totalorder %s28, 0
        %s302 = scalar_select %p301, %s28, 0
        %s303 = sadd.s32 %s302, %s300
        %s304 = smul.addr %s303, 2
        %s305 = scalar_lea.vmem %s1, %s304
        %p306 = pneg %p85
        %p307 = pneg %p82
        %s308 = smul.u32 4, %s29
        %p309 = scmp.lt.s32.totalorder %s308, 7
        %s310 = scalar_select %p309, %s308, 7
        %p311 = scmp.lt.s32.totalorder %s28, 0
        %s312 = scalar_select %p311, %s28, 0
        %s313 = sadd.s32 %s312, %s310
        %s314 = smul.addr %s313, 2
        %s315 = scalar_lea.vmem %s2, %s314
        %p316 = pneg %p113
        %p317 = pneg %p110
        %p318 = pneg %p134
        %p319 = pneg %p131
        %p320 = pneg %p155
        %p321 = pneg %p152
        %p322 = pneg %p183
        %p323 = pneg %p180
        %s324 = sand.u32 %s170, 1
        %s325 = scalar_lea.sflag [#allocation5], %s324
        %s326 = sand.u32 %s170, 1
        %s327 = smul.addr %s326, 16
        %s328 = scalar_lea.vmem [#allocation8], %s327
        %p329 = pneg %p209
        %p330 = pneg %p206
        %s331 = smul.u32 4, %s29
        %p332 = scmp.lt.s32.totalorder %s331, 7
        %s333 = scalar_select %p332, %s331, 7
        %p334 = scmp.lt.s32.totalorder %s28, 0
        %s335 = scalar_select %p334, %s28, 0
        %s336 = sadd.s32 %s335, %s333
        %s337 = smul.addr %s336, 2
        %s338 = scalar_lea.vmem %s1, %s337
        %s339 = smul.u32 4, %s29
        %s340 = smul.u32 4, %s29
        %p341 = scmp.lt.s32.totalorder %s340, 7
        %s342 = scalar_select %p341, %s340, 7
        %p343 = scmp.lt.s32.totalorder %s28, 0
        %s344 = scalar_select %p343, %s28, 0
        %s345 = sadd.s32 %s344, %s342
        %s346 = smul.addr %s345, 2
        %s347 = scalar_lea.vmem %s2, %s346
        %s348 = smul.u32 4, %s29
        %s349 = smul.u32 4, %s29
        %p351 = scmp.eq.s32.totalorder %s29, 0
        // Predicated region
        $region49: #{tpu_custom_call.1} parent=39 // pred_check
          %p352 = pneg %p351
        $region50: #{tpu_custom_call.1} parent=39 // pred_check_branch
          %354 = sbr.rel (%p352) target = $region52
        $region51: #{tpu_custom_call.1} parent=39 // pred_region
          %v355 = vld [vmem:[#allocation3] sm:$0xf]
          %vm356 = vcmask 257024
          %357 = vst.msk [vmem:[#allocation2] sm:$0xf] %vm356, %v355
        $region52: #{tpu_custom_call.1} parent=39 // pred_fallthru
          _
        %v358 = vld [vmem:[#allocation6] sm:$0xf]
        %v359 = vld [vmem:[#allocation6 + $0x4] sm:$0xf]
        %v360 = vld [vmem:[#allocation6 + $0x8] sm:$0xf]
        %v361 = vld [vmem:[#allocation6 + $0xc] sm:$0xf]
        %v362 = vld [vmem:[%s4] sm:$0x1]
        %v364 = vlaneseq
        %v365 = vshrl.u32 %v364, 7
        %v366 = vsub.s32 0, %v365
        %v367 = vrot.slane %v362, %v366
        %v368 = vld [vmem:[#allocation2] sm:$0xf]
        %v369 = vld [vmem:[%s347] sm:$0x3]
        %v370 = vunpack.c.l.bf16 %v369
        %372 = vset.pattern.permute.xlu0 0
        %373 = vperm.xlu0 %372, %v370
        %v374 = vpop.permute.xlu0 %373
        %v377 = vunpack.c.l.s4 839922192
        %v378 = vunpack.c.0.s8 %v377
        %v379 = vlaneseq
        %v380 = vshrl.u32 %v379, 7
        %v381 = vsub.s32 %v378, %v380
        %v382 = vrot.slane %v374, %v381
        %v383 = vmul.f32 %v368, %v382
        %v384 = vld [vmem:[%s338] sm:$0x3]
        %v385 = vunpack.c.l.bf16 %v384
        %v386 = vpack.c.bf16 %v383, %v383
        %v391 = vunpack.c.l.b16 %v358
        %v392 = vunpack.c.l.b16 %v359
        %v393 = vunpack.c.l.b16 %v360
        %v394 = vunpack.c.l.b16 %v361
        %v395 = vpack.c.b16 %v392, %v391
        %v396 = vpack.c.b16 %v394, %v393
        %vm399 = vcmask 261120
        %v401 = vsel %vm399, %v386, 0
        %403 = vmatprep.subr.bf16.mxu0 0
        %404 = vmatpush1.bf16.msra.mxu0 0
        %405 = vmatprep.subr.bf16.mxu0 0
        %406 = vmatpush1.bf16.msra.mxu0 0
        %407 = vmatprep.subr.bf16.mxu0 0
        %408 = vmatpush1.bf16.msra.mxu0 0
        %409 = vmatprep.subr.bf16.mxu0 0
        %410 = vmatpush1.bf16.msra.mxu0 0
        %411 = vmatprep.subr.bf16.mxu0 0
        %412 = vmatpush1.bf16.msra.mxu0 0
        %413 = vmatprep.subr.bf16.mxu0 0
        %414 = vmatpush1.bf16.msra.mxu0 0
        %415 = vmatprep.subr.bf16.mxu0 0
        %416 = vmatpush1.bf16.msra.mxu0 %v396
        %417 = vmatprep.subr.bf16.mxu0 0
        %418 = vmatpush1.bf16.msra.mxu0 %v395
        %419 = vmatprep.subr.bf16.mxu0 0
        %420 = vmatpush2.bf16.msra.mxu0 0
        %421 = vmatprep.subr.bf16.mxu0 0
        %422 = vmatpush2.bf16.msra.mxu0 0
        %423 = vmatprep.subr.bf16.mxu0 0
        %424 = vmatpush2.bf16.msra.mxu0 0
        %425 = vmatprep.subr.bf16.mxu0 0
        %426 = vmatpush2.bf16.msra.mxu0 0
        %427 = vmatprep.subr.bf16.mxu0 0
        %428 = vmatpush2.bf16.msra.mxu0 0
        %429 = vmatprep.subr.bf16.mxu0 0
        %430 = vmatpush2.bf16.msra.mxu0 0
        %431 = vmatprep.subr.bf16.mxu0 0
        %432 = vmatpush2.bf16.msra.mxu0 0
        %433 = vmatprep.subr.bf16.mxu0 0
        %434 = vmatpush2.bf16.msra.mxu0 0
        %435 = vmatprep.mubr.bf16.mxu0 0
        %436 = vmatmul.mubr.bf16.gmra.mxu0 %v401
        %v437 = vpop.f32.mrf.mxu0
        %v438 = vadd.f32 0.0, %v437
        %v439 = vpop.f32.mrf.mxu0
        %v440 = vpop.f32.mrf.mxu0
        %v441 = vpop.f32.mrf.mxu0
        %442 = vdwg.mxu0
        %v443 = vadd.f32 %v385, %v438
        %v444 = vxor.u32 %v443, 2147483648
        %v445 = vmul.f32 %v444, 1.442695
        %v446 = vpow.pop %v445
        %v447 = vadd.f32 %v446, 1.0
        %v448 = vrcp.pop %v447
        %v449 = vmul.f32 1.0, %v448
        %450 = vrot.lane.b32.xlu0 %v367, 64
        %v451 = vpop.permute.xlu0 %450
        %v453 = vadd.f32 %v438, %v451
        %455 = vrot.lane.b32.xlu0 %v453, 64
        %v456 = vpop.permute.xlu0 %455
        %v458 = vmul.f32 %v449, %v456
        %460 = vrot.lane.b32.xlu0 %v458, 64
        %v461 = vpop.permute.xlu0 %460
        %v463 = vadd.f32 %v385, %v461
        %v464 = vtanh.pop %v463
        %v465 = vsub.f32 1.0, %v449
        %467 = vrot.lane.b32.xlu0 %v464, 96
        %v468 = vpop.permute.xlu0 %467
        %v470 = vmul.f32 %v465, %v468
        %472 = vrot.lane.b32.xlu0 %v383, 32
        %v473 = vpop.permute.xlu0 %472
        %v475 = vmul.f32 %v449, %v473
        %v476 = vadd.f32 %v470, %v475
        %478 = vrot.lane.b32.xlu0 %v476, 96
        %v479 = vpop.permute.xlu0 %478
        %vm481 = vcmask 257024
        %482 = vst.msk [vmem:[%s328] sm:$0xf] %vm481, %v479
        %s483 = scalar_lea.vmem %s347, 2
        %v484 = vld [vmem:[%s483] sm:$0x3]
        %v485 = vunpack.c.l.bf16 %v484
        %487 = vset.pattern.permute.xlu0 0
        %488 = vperm.xlu0 %487, %v485
        %v489 = vpop.permute.xlu0 %488
        %v492 = vunpack.c.l.s4 839922192
        %v493 = vunpack.c.0.s8 %v492
        %v494 = vlaneseq
        %v495 = vshrl.u32 %v494, 7
        %v496 = vsub.s32 %v493, %v495
        %v497 = vrot.slane %v489, %v496
        %v498 = vmul.f32 %v476, %v497
        %s499 = scalar_lea.vmem %s338, 2
        %v500 = vld [vmem:[%s499] sm:$0x3]
        %v501 = vunpack.c.l.bf16 %v500
        %v502 = vpack.c.bf16 %v498, %v498
        %504 = vrot.lane.b32.xlu0 %v502, 96
        %v505 = vpop.permute.xlu0 %504
        %v507 = vsel %vm399, %v505, 0
        %509 = vmatprep.subr.bf16.mxu0 0
        %510 = vmatpush1.bf16.msra.mxu0 0
        %511 = vmatprep.subr.bf16.mxu0 0
        %512 = vmatpush1.bf16.msra.mxu0 0
        %513 = vmatprep.subr.bf16.mxu0 0
        %514 = vmatpush1.bf16.msra.mxu0 0
        %515 = vmatprep.subr.bf16.mxu0 0
        %516 = vmatpush1.bf16.msra.mxu0 0
        %517 = vmatprep.subr.bf16.mxu0 0
        %518 = vmatpush1.bf16.msra.mxu0 0
        %519 = vmatprep.subr.bf16.mxu0 0
        %520 = vmatpush1.bf16.msra.mxu0 0
        %521 = vmatprep.subr.bf16.mxu0 0
        %522 = vmatpush1.bf16.msra.mxu0 %v396
        %523 = vmatprep.subr.bf16.mxu0 0
        %524 = vmatpush1.bf16.msra.mxu0 %v395
        %525 = vmatprep.subr.bf16.mxu0 0
        %526 = vmatpush2.bf16.msra.mxu0 0
        %527 = vmatprep.subr.bf16.mxu0 0
        %528 = vmatpush2.bf16.msra.mxu0 0
        %529 = vmatprep.subr.bf16.mxu0 0
        %530 = vmatpush2.bf16.msra.mxu0 0
        %531 = vmatprep.subr.bf16.mxu0 0
        %532 = vmatpush2.bf16.msra.mxu0 0
        %533 = vmatprep.subr.bf16.mxu0 0
        %534 = vmatpush2.bf16.msra.mxu0 0
        %535 = vmatprep.subr.bf16.mxu0 0
        %536 = vmatpush2.bf16.msra.mxu0 0
        %537 = vmatprep.subr.bf16.mxu0 0
        %538 = vmatpush2.bf16.msra.mxu0 0
        %539 = vmatprep.subr.bf16.mxu0 0
        %540 = vmatpush2.bf16.msra.mxu0 0
        %541 = vmatprep.mubr.bf16.mxu0 0
        %542 = vmatmul.mubr.bf16.gmra.mxu0 %v507
        %v543 = vpop.f32.mrf.mxu0
        %v544 = vadd.f32 0.0, %v543
        %v545 = vpop.f32.mrf.mxu0
        %v546 = vpop.f32.mrf.mxu0
        %v547 = vpop.f32.mrf.mxu0
        %548 = vdwg.mxu0
        %v549 = vadd.f32 %v501, %v544
        %v550 = vxor.u32 %v549, 2147483648
        %v551 = vmul.f32 %v550, 1.442695
        %v552 = vpow.pop %v551
        %v553 = vadd.f32 %v552, 1.0
        %v554 = vrcp.pop %v553
        %v555 = vmul.f32 1.0, %v554
        %v556 = vadd.f32 %v544, %v451
        %558 = vrot.lane.b32.xlu0 %v556, 64
        %v559 = vpop.permute.xlu0 %558
        %v561 = vmul.f32 %v555, %v559
        %563 = vrot.lane.b32.xlu0 %v561, 64
        %v564 = vpop.permute.xlu0 %563
        %v566 = vadd.f32 %v501, %v564
        %v567 = vtanh.pop %v566
        %v568 = vsub.f32 1.0, %v555
        %570 = vrot.lane.b32.xlu0 %v567, 96
        %v571 = vpop.permute.xlu0 %570
        %v573 = vmul.f32 %v568, %v571
        %v574 = vmul.f32 %v555, %v498
        %v575 = vadd.f32 %v573, %v574
        %577 = vrot.lane.b32.xlu0 %v575, 96
        %v578 = vpop.permute.xlu0 %577
        %s580 = scalar_lea.vmem %s328, 4 [#allocation8]
        %581 = vst.msk [vmem:[%s580] sm:$0xf] %vm481, %v578
        %s582 = scalar_lea.vmem %s347, 4
        %v583 = vld [vmem:[%s582] sm:$0x3]
        %v584 = vunpack.c.l.bf16 %v583
        %586 = vset.pattern.permute.xlu0 0
        %587 = vperm.xlu0 %586, %v584
        %v588 = vpop.permute.xlu0 %587
        %v591 = vunpack.c.l.s4 839922192
        %v592 = vunpack.c.0.s8 %v591
        %v593 = vlaneseq
        %v594 = vshrl.u32 %v593, 7
        %v595 = vsub.s32 %v592, %v594
        %v596 = vrot.slane %v588, %v595
        %v597 = vmul.f32 %v575, %v596
        %s598 = scalar_lea.vmem %s338, 4
        %v599 = vld [vmem:[%s598] sm:$0x3]
        %v600 = vunpack.c.l.bf16 %v599
        %v601 = vpack.c.bf16 %v597, %v597
        %603 = vrot.lane.b32.xlu0 %v601, 96
        %v604 = vpop.permute.xlu0 %603
        %v606 = vsel %vm399, %v604, 0
        %608 = vmatprep.subr.bf16.mxu0 0
        %609 = vmatpush1.bf16.msra.mxu0 0
        %610 = vmatprep.subr.bf16.mxu0 0
        %611 = vmatpush1.bf16.msra.mxu0 0
        %612 = vmatprep.subr.bf16.mxu0 0
        %613 = vmatpush1.bf16.msra.mxu0 0
        %614 = vmatprep.subr.bf16.mxu0 0
        %615 = vmatpush1.bf16.msra.mxu0 0
        %616 = vmatprep.subr.bf16.mxu0 0
        %617 = vmatpush1.bf16.msra.mxu0 0
        %618 = vmatprep.subr.bf16.mxu0 0
        %619 = vmatpush1.bf16.msra.mxu0 0
        %620 = vmatprep.subr.bf16.mxu0 0
        %621 = vmatpush1.bf16.msra.mxu0 %v396
        %622 = vmatprep.subr.bf16.mxu0 0
        %623 = vmatpush1.bf16.msra.mxu0 %v395
        %624 = vmatprep.subr.bf16.mxu0 0
        %625 = vmatpush2.bf16.msra.mxu0 0
        %626 = vmatprep.subr.bf16.mxu0 0
        %627 = vmatpush2.bf16.msra.mxu0 0
        %628 = vmatprep.subr.bf16.mxu0 0
        %629 = vmatpush2.bf16.msra.mxu0 0
        %630 = vmatprep.subr.bf16.mxu0 0
        %631 = vmatpush2.bf16.msra.mxu0 0
        %632 = vmatprep.subr.bf16.mxu0 0
        %633 = vmatpush2.bf16.msra.mxu0 0
        %634 = vmatprep.subr.bf16.mxu0 0
        %635 = vmatpush2.bf16.msra.mxu0 0
        %636 = vmatprep.subr.bf16.mxu0 0
        %637 = vmatpush2.bf16.msra.mxu0 0
        %638 = vmatprep.subr.bf16.mxu0 0
        %639 = vmatpush2.bf16.msra.mxu0 0
        %640 = vmatprep.mubr.bf16.mxu0 0
        %641 = vmatmul.mubr.bf16.gmra.mxu0 %v606
        %v642 = vpop.f32.mrf.mxu0
        %v643 = vadd.f32 0.0, %v642
        %v644 = vpop.f32.mrf.mxu0
        %v645 = vpop.f32.mrf.mxu0
        %v646 = vpop.f32.mrf.mxu0
        %647 = vdwg.mxu0
        %v648 = vadd.f32 %v600, %v643
        %v649 = vxor.u32 %v648, 2147483648
        %v650 = vmul.f32 %v649, 1.442695
        %v651 = vpow.pop %v650
        %v652 = vadd.f32 %v651, 1.0
        %v653 = vrcp.pop %v652
        %v654 = vmul.f32 1.0, %v653
        %v655 = vadd.f32 %v643, %v451
        %657 = vrot.lane.b32.xlu0 %v655, 64
        %v658 = vpop.permute.xlu0 %657
        %v660 = vmul.f32 %v654, %v658
        %662 = vrot.lane.b32.xlu0 %v660, 64
        %v663 = vpop.permute.xlu0 %662
        %v665 = vadd.f32 %v600, %v663
        %v666 = vtanh.pop %v665
        %v667 = vsub.f32 1.0, %v654
        %669 = vrot.lane.b32.xlu0 %v666, 96
        %v670 = vpop.permute.xlu0 %669
        %v672 = vmul.f32 %v667, %v670
        %v673 = vmul.f32 %v654, %v597
        %v674 = vadd.f32 %v672, %v673
        %676 = vrot.lane.b32.xlu0 %v674, 96
        %v677 = vpop.permute.xlu0 %676
        %s679 = scalar_lea.vmem %s328, 8 [#allocation8]
        %680 = vst.msk [vmem:[%s679] sm:$0xf] %vm481, %v677
        %s681 = scalar_lea.vmem %s347, 6
        %v682 = vld [vmem:[%s681] sm:$0x3]
        %v683 = vunpack.c.l.bf16 %v682
        %685 = vset.pattern.permute.xlu0 0
        %686 = vperm.xlu0 %685, %v683
        %v687 = vpop.permute.xlu0 %686
        %v690 = vunpack.c.l.s4 839922192
        %v691 = vunpack.c.0.s8 %v690
        %v692 = vlaneseq
        %v693 = vshrl.u32 %v692, 7
        %v694 = vsub.s32 %v691, %v693
        %v695 = vrot.slane %v687, %v694
        %v696 = vmul.f32 %v674, %v695
        %s697 = scalar_lea.vmem %s338, 6
        %v698 = vld [vmem:[%s697] sm:$0x3]
        %v699 = vunpack.c.l.bf16 %v698
        %v700 = vpack.c.bf16 %v696, %v696
        %702 = vrot.lane.b32.xlu0 %v700, 96
        %v703 = vpop.permute.xlu0 %702
        %v705 = vsel %vm399, %v703, 0
        %707 = vmatprep.subr.bf16.mxu0 0
        %708 = vmatpush1.bf16.msra.mxu0 0
        %709 = vmatprep.subr.bf16.mxu0 0
        %710 = vmatpush1.bf16.msra.mxu0 0
        %711 = vmatprep.subr.bf16.mxu0 0
        %712 = vmatpush1.bf16.msra.mxu0 0
        %713 = vmatprep.subr.bf16.mxu0 0
        %714 = vmatpush1.bf16.msra.mxu0 0
        %715 = vmatprep.subr.bf16.mxu0 0
        %716 = vmatpush1.bf16.msra.mxu0 0
        %717 = vmatprep.subr.bf16.mxu0 0
        %718 = vmatpush1.bf16.msra.mxu0 0
        %719 = vmatprep.subr.bf16.mxu0 0
        %720 = vmatpush1.bf16.msra.mxu0 %v396
        %721 = vmatprep.subr.bf16.mxu0 0
        %722 = vmatpush1.bf16.msra.mxu0 %v395
        %723 = vmatprep.subr.bf16.mxu0 0
        %724 = vmatpush2.bf16.msra.mxu0 0
        %725 = vmatprep.subr.bf16.mxu0 0
        %726 = vmatpush2.bf16.msra.mxu0 0
        %727 = vmatprep.subr.bf16.mxu0 0
        %728 = vmatpush2.bf16.msra.mxu0 0
        %729 = vmatprep.subr.bf16.mxu0 0
        %730 = vmatpush2.bf16.msra.mxu0 0
        %731 = vmatprep.subr.bf16.mxu0 0
        %732 = vmatpush2.bf16.msra.mxu0 0
        %733 = vmatprep.subr.bf16.mxu0 0
        %734 = vmatpush2.bf16.msra.mxu0 0
        %735 = vmatprep.subr.bf16.mxu0 0
        %736 = vmatpush2.bf16.msra.mxu0 0
        %737 = vmatprep.subr.bf16.mxu0 0
        %738 = vmatpush2.bf16.msra.mxu0 0
        %739 = vmatprep.mubr.bf16.mxu0 0
        %740 = vmatmul.mubr.bf16.gmra.mxu0 %v705
        %v741 = vpop.f32.mrf.mxu0
        %v742 = vadd.f32 0.0, %v741
        %v743 = vpop.f32.mrf.mxu0
        %v744 = vpop.f32.mrf.mxu0
        %v745 = vpop.f32.mrf.mxu0
        %746 = vdwg.mxu0
        %v747 = vadd.f32 %v699, %v742
        %v748 = vxor.u32 %v747, 2147483648
        %v749 = vmul.f32 %v748, 1.442695
        %v750 = vpow.pop %v749
        %v751 = vadd.f32 %v750, 1.0
        %v752 = vrcp.pop %v751
        %v753 = vmul.f32 1.0, %v752
        %v754 = vadd.f32 %v742, %v451
        %756 = vrot.lane.b32.xlu0 %v754, 64
        %v757 = vpop.permute.xlu0 %756
        %v759 = vmul.f32 %v753, %v757
        %761 = vrot.lane.b32.xlu0 %v759, 64
        %v762 = vpop.permute.xlu0 %761
        %v764 = vadd.f32 %v699, %v762
        %v765 = vtanh.pop %v764
        %v766 = vsub.f32 1.0, %v753
        %768 = vrot.lane.b32.xlu0 %v765, 96
        %v769 = vpop.permute.xlu0 %768
        %v771 = vmul.f32 %v766, %v769
        %v772 = vmul.f32 %v753, %v696
        %v773 = vadd.f32 %v771, %v772
        %775 = vrot.lane.b32.xlu0 %v773, 96
        %v776 = vpop.permute.xlu0 %775
        %s778 = scalar_lea.vmem %s328, 12 [#allocation8]
        %779 = vst.msk [vmem:[%s778] sm:$0xf] %vm481, %v776
        %780 = vst.msk [vmem:[#allocation2] sm:$0xf] %vm481, %v776
        %p781 = scmp.eq.s32.totalorder %s29, 1
        // Predicated region
        $region53: #{tpu_custom_call.1} parent=39 // pred_check
          %p782 = pneg %p781
        $region54: #{tpu_custom_call.1} parent=39 // pred_check_branch
          %784 = sbr.rel (%p782) target = $region56
        $region55: #{tpu_custom_call.1} parent=39 // pred_region
          %785 = vst.msk [vmem:[#allocation9] sm:$0xf] %vm481, %v776
        $region56: #{tpu_custom_call.1} parent=39 // pred_fallthru
          _
        %s786 = sand.u32 %s170, 1
        %s787 = scalar_lea.sflag [#allocation5], %s786
        %s788 = sand.u32 %s170, 1
        %s789 = smul.addr %s788, 16
        %s790 = scalar_lea.vmem [#allocation8], %s789
        // Predicated region
        $region57: #{tpu_custom_call.1} parent=39 // pred_check
          %p791 = pneg %p180
        $region58: #{tpu_custom_call.1} parent=39 // pred_check_branch
          %793 = sbr.rel (%p791) target = $region60
        $region59: #{tpu_custom_call.1} parent=39 // pred_region
          %s794 = smul.u32 4, %s29
          %s796 = ssub.s32 256, 256
          %797 = vsyncadd %s787, %s796
          %s798 = sadd.s32 %s28, %s794
          %s799 = smul.addr %s798, 64
          %s800 = scalar_lea.hbm %s5, %s799
          %s801 = sshll.u32 %s790, 4
          %s802 = int_to_ptr.vmem [resolvable:$true] %s801
          %807 = dma.vmem_to_hbm [thread:$0]  %s802, 256, %s800, %s787, 64, 64, 4
        $region60: #{tpu_custom_call.1} parent=39 // pred_fallthru
          _
        // Predicated region
        $region61: #{tpu_custom_call.1} parent=39 // pred_check
          %p808 = pneg %p206
        $region62: #{tpu_custom_call.1} parent=39 // pred_check_branch
          %810 = sbr.rel (%p808) target = $region64
        $region63: #{tpu_custom_call.1} parent=39 // pred_region
          %s812 = ssub.s32 64, 64
          %813 = vsyncadd [#allocation10], %s812
          %s814 = smul.addr %s28, 64
          %s815 = scalar_lea.hbm %s6, %s814
          %s817 = sshll.u32 [#allocation9], 4
          %s818 = int_to_ptr.vmem [resolvable:$true] %s817
          %820 = dma.vmem_to_hbm [thread:$0]  %s818, 64, %s815, [#allocation10]
        $region64: #{tpu_custom_call.1} parent=39 // pred_fallthru
          _
        // Predicated region
        $region65: #{tpu_custom_call.1} parent=39 // pred_check
          %p821 = pneg %p206
        $region66: #{tpu_custom_call.1} parent=39 // pred_check_branch
          %823 = sbr.rel (%p821) target = $region68
        $region67: #{tpu_custom_call.1} parent=39 // pred_region
          %824 = dma.done [#allocation10], 64
        $region68: #{tpu_custom_call.1} parent=39 // pred_fallthru
          _
      $region40: #{tpu_custom_call.1} parent=5 // pred_fallthru
        _
      %p825 = scmp.le.s32.totalorder 2, %s19
      // Predicated region
      $region69: #{tpu_custom_call.1} parent=5 // pred_check
        %p826 = pneg %p825
      $region70: #{tpu_custom_call.1} parent=5 // pred_check_branch
        %828 = sbr.rel (%p826) target = $region72
      $region71: #{tpu_custom_call.1} parent=5 // pred_region
        %s829 = ssub.s32 %s19, 2
        // Predicated region
        $region73: #{tpu_custom_call.1} parent=71 // pred_check
          %p830 = pneg %p186
        $region74: #{tpu_custom_call.1} parent=71 // pred_check_branch
          %832 = sbr.rel (%p830) target = $region76
        $region75: #{tpu_custom_call.1} parent=71 // pred_region
          %s833 = sand.u32 %s171, 1
          %s834 = scalar_lea.sflag [#allocation5], %s833
          %s835 = sand.u32 %s171, 1
          %s836 = smul.addr %s835, 16
          %s837 = scalar_lea.vmem [#allocation8], %s836
          %838 = dma.done %s834, 256
        $region76: #{tpu_custom_call.1} parent=71 // pred_fallthru
          _
      $region72: #{tpu_custom_call.1} parent=5 // pred_fallthru
        _
    $region6: #{tpu_custom_call.1} parent=1 // loop_footer
      %s23 = sadd.s32 1, %s19
    $region7: #{tpu_custom_call.1} parent=1 // loop_footer_branch
      %18 = sbr.rel target = $region3
    $region8: #{tpu_custom_call.1} parent=1 // loop_exit
      _
    %839 = vsyncpa [#allocation4], 1
    %s840 = scalar_lea.sflag [#allocation4], 1
    %841 = vsyncpa %s840, 1
    %842 = vsyncpa [#allocation7], 1
    %843 = vsyncpa [#allocation5], 1
    %s844 = scalar_lea.sflag [#allocation5], 1
    %845 = vsyncpa %s844, 1
    %846 = vsyncpa [#allocation10], 1

</llo_original>
